<compile_context>
chip_gen: v5e
topology: v5e:2x2
jax: 0.10.0
libtpu: 0.0.40
codegen_flags: <defaults>
</compile_context>

<pallas_src>
import functools

import jax
import jax.numpy as jnp
from jax import lax
from jax.experimental import pallas as pl
from jax.experimental.pallas import tpu as pltpu


# ----------------------------------------------------------------------------
# Kernels
# ----------------------------------------------------------------------------
def _qkv_projection_kernel(x_ref, w_ref, b_ref, q_ref, k_ref, v_ref, *, inv_scale):
    """Grid = (row_tile,).  Fused QKV projection over flattened (B*S) rows.

    x_ref : (TR, E)   bf16
    w_ref : (E, 3E)   bf16  fused [Wq | Wk | Wv]  (resident)
    b_ref : (1, 3E)   f32   fused [bq | bk | bv]  (resident)
    q_ref : (TR, E)   bf16  (pre-scaled by 1/sqrt(E))
    k_ref : (TR, E)   bf16
    v_ref : (TR, E)   bf16
    """
    x = x_ref[...]
    qkv = jnp.dot(x, w_ref[...], preferred_element_type=jnp.float32) + b_ref[...]
    e_dim = q_ref.shape[-1]
    q_ref[...] = (qkv[:, :e_dim] * inv_scale).astype(q_ref.dtype)  # scale folded into Q
    k_ref[...] = qkv[:, e_dim:2 * e_dim].astype(k_ref.dtype)
    v_ref[...] = qkv[:, 2 * e_dim:].astype(v_ref.dtype)


def _attention_kernel(q_ref, k_ref, v_ref, out_ref, attn_ref, *, exp_in_bf16):
    """Grid = (batch, query_tile).  Both axes are fully parallel (no carry).

    q_ref    : (1, TQ, E) bf16 (pre-scaled)
    k_ref    : (1, S,  E) bf16 (re-used across query tiles of a batch element)
    v_ref    : (1, S,  E) bf16
    out_ref  : (1, TQ, E) out_dtype
    attn_ref : (1, TQ, S) attn_dtype
    """
    q = q_ref[0]
    k = k_ref[0]
    v = v_ref[0]

    # scores = Q @ K^T without materializing a transpose: contract last dims.
    scores = lax.dot_general(
        q, k,
        dimension_numbers=(((1,), (1,)), ((), ())),
        preferred_element_type=jnp.float32)             # (TQ, S) f32

    # Numerically stable softmax along the key axis.
    m = jnp.max(scores, axis=-1, keepdims=True)
    shifted = scores - m
    if exp_in_bf16:
        # EUP-bound option for v6e/v7x (bf16 EUP); range is safe after max-sub.
        p = jnp.exp(shifted.astype(jnp.bfloat16)).astype(jnp.float32)
    else:
        p = jnp.exp(shifted)
    denom = jnp.sum(p, axis=-1, keepdims=True)
    r = pl.reciprocal(denom, approx=True)                # EUP vrcp (free slot)
    r = r * (2.0 - denom * r)                            # one Newton step -> f32 accuracy
    attn = p * r                                         # (TQ, S) f32

    # Output = attn @ V (bf16 operands, f32 accumulation).
    out = jnp.dot(attn.astype(v.dtype), v, preferred_element_type=jnp.float32)

    out_ref[0] = out.astype(out_ref.dtype)
    attn_ref[0] = attn.astype(attn_ref.dtype)

    # TODO(synk): the optional `mask` argument of the PyTorch forward is not
    # wired in (the default mask=None path is what is implemented here).


# ----------------------------------------------------------------------------
# Hardware-aware tile / VMEM-budget selection
# ----------------------------------------------------------------------------
def _vmem_budget_bytes(fraction=0.75, fallback=128 * 1024 * 1024):
    """~75% of physical VMEM: ≈48 MiB on v7x (64 MiB), ≈96 MiB on v5e/v6e (128 MiB)."""
    try:
        cap = int(pltpu.get_tpu_info().vmem_capacity_bytes)
    except Exception:
        cap = fallback
    return int(cap * fraction)


def _attn_step_bytes(tq, seq_len, embed_dim, attn_bytes,
                     compute_bytes=2, out_bytes=4):
    """Approximate per-step VMEM footprint of the attention call."""
    kv_resident = 2 * 2 * seq_len * embed_dim * compute_bytes   # K,V double-buffered
    q_in = 2 * tq * embed_dim * compute_bytes                   # Q tile double-buffered
    out_buf = 2 * tq * embed_dim * out_bytes                    # output double-buffer
    attn_buf = 2 * tq * seq_len * attn_bytes                    # attn-weights double-buffer
    temps = 3 * tq * seq_len * 4                                # scores / exp / attn f32 live
    return kv_resident + q_in + out_buf + attn_buf + temps


def _pick_block_q(seq_len, embed_dim, attn_bytes, vmem_budget, max_block=1024):
    """Largest query tile (multiple of 16 for bf16 sublane packing, or full S)
    dividing S that fits the VMEM budget."""
    candidates = []
    if seq_len <= max_block:
        candidates.append(seq_len)
    t = min(max_block, seq_len)
    t -= t % 16
    while t >= 16:
        if seq_len % t == 0 and t != seq_len:
            candidates.append(t)
        t -= 16
    if not candidates:
        candidates.append(seq_len)
    for tq in candidates:
        if _attn_step_bytes(tq, seq_len, embed_dim, attn_bytes) <= vmem_budget:
            return tq
    return candidates[-1]     # best effort (smallest candidate)


def _largest_divisor_tile(n, max_tile, align):
    """Largest t <= max_tile with t % align == 0 and n % t == 0, else n."""
    if n <= max_tile:
        return n
    t = (max_tile // align) * align
    while t >= align:
        if n % t == 0:
            return t
        t -= align
    return n


# ----------------------------------------------------------------------------
# Wrapper
# ----------------------------------------------------------------------------
def self_attention(x, wq, wk, wv, bq, bk, bv, *,
                   compute_dtype=jnp.bfloat16,
                   attn_dtype=jnp.float32,     # bf16 halves the dominant B*S*S writeback
                   out_dtype=jnp.float32,
                   exp_in_bf16=False):         # enable on v6e/v7x when EUP-bound
    """x: (B, S, E) f32; weights: (E, E) in (in, out) layout; biases: (E,)."""
    B, S, E = x.shape
    inv_scale = 1.0 / float(E) ** 0.5

    vmem_budget = _vmem_budget_bytes()
    compute_bytes = jnp.dtype(compute_dtype).itemsize
    attn_bytes = jnp.dtype(attn_dtype).itemsize
    out_bytes = jnp.dtype(out_dtype).itemsize

    # Fuse projections; cast matmul operands to bf16 ONCE in the wrapper.
    w_qkv = jnp.concatenate([wq, wk, wv], axis=1).astype(compute_dtype)   # (E, 3E)
    b_qkv = jnp.concatenate([bq, bk, bv]).reshape(1, 3 * E).astype(jnp.float32)
    x2 = x.reshape(B * S, E).astype(compute_dtype)                        # flatten rows

    # ---------------- Fused QKV projection (its own pipelined pallas_call) ---
    rows = B * S
    tr = _largest_divisor_tile(rows, 512, 16)
    proj_cost = pl.CostEstimate(
        flops=2 * rows * E * 3 * E,
        transcendentals=0,
        bytes_accessed=(rows * E + E * 3 * E + 3 * rows * E) * compute_bytes + 3 * E * 4,
    )
    q2, k2, v2 = pl.pallas_call(
        functools.partial(_qkv_projection_kernel, inv_scale=inv_scale),
        out_shape=(jax.ShapeDtypeStruct((rows, E), compute_dtype),
                   jax.ShapeDtypeStruct((rows, E), compute_dtype),
                   jax.ShapeDtypeStruct((rows, E), compute_dtype)),
        grid_spec=pltpu.PrefetchScalarGridSpec(
            num_scalar_prefetch=0,
            grid=(rows // tr,),
            in_specs=[
                pl.BlockSpec((tr, E), lambda i: (i, 0)),        # x rows
                pl.BlockSpec((E, 3 * E), lambda i: (0, 0)),     # fused W_qkv (resident)
                pl.BlockSpec((1, 3 * E), lambda i: (0, 0)),     # fused b_qkv (resident)
            ],
            out_specs=[
                pl.BlockSpec((tr, E), lambda i: (i, 0)),        # Q (pre-scaled, bf16)
                pl.BlockSpec((tr, E), lambda i: (i, 0)),        # K
                pl.BlockSpec((tr, E), lambda i: (i, 0)),        # V
            ],
        ),
        compiler_params=pltpu.CompilerParams(
            dimension_semantics=("parallel",),
            vmem_limit_bytes=vmem_budget,
        ),
        cost_estimate=proj_cost,
    )(x2, w_qkv, b_qkv)

    q = q2.reshape(B, S, E)
    k = k2.reshape(B, S, E)
    v = v2.reshape(B, S, E)

    # ---------------- Attention (scores -> softmax -> weighted sum) ----------
    tq = _pick_block_q(S, E, attn_bytes, vmem_budget)
    num_q_tiles = S // tq

    attn_cost = pl.CostEstimate(
        flops=2 * B * 2 * S * S * E,
        transcendentals=B * S * (S + 1),          # exp + reciprocal
        bytes_accessed=3 * B * S * E * compute_bytes
                       + B * S * E * out_bytes
                       + B * S * S * attn_bytes,
    )
    # NOTE: for lane-dense (unmasked) stores E and S should be multiples of 128;
    # small E (like the unit test's 32) falls back to masked partial stores.
    out, attn = pl.pallas_call(
        functools.partial(_attention_kernel, exp_in_bf16=exp_in_bf16),
        out_shape=(
            jax.ShapeDtypeStruct((B, S, E), out_dtype),
            jax.ShapeDtypeStruct((B, S, S), attn_dtype),
        ),
        grid_spec=pltpu.PrefetchScalarGridSpec(
            num_scalar_prefetch=0,
            grid=(B, num_q_tiles),
            in_specs=[
                pl.BlockSpec((1, tq, E), lambda b, i: (b, i, 0)),   # Q tile
                pl.BlockSpec((1, S, E), lambda b, i: (b, 0, 0)),    # K (full keys per batch)
                pl.BlockSpec((1, S, E), lambda b, i: (b, 0, 0)),    # V
            ],
            out_specs=[
                pl.BlockSpec((1, tq, E), lambda b, i: (b, i, 0)),   # output
                pl.BlockSpec((1, tq, S), lambda b, i: (b, i, 0)),   # attention weights
            ],
        ),
        compiler_params=pltpu.CompilerParams(
            # No cross-iteration state -> both axes parallel (megacore over
            # batch AND query tiles; works at B=1 on v7x's two cores).
            dimension_semantics=("parallel", "parallel"),
            vmem_limit_bytes=vmem_budget,
        ),
        cost_estimate=attn_cost,
    )(q, k, v)
    return out, attn


# ----------------------------------------------------------------------------
# References
# ----------------------------------------------------------------------------
def _reference_f32(x, wq, wk, wv, bq, bk, bv):
    """Pure-f32 JAX reference mirroring the PyTorch forward."""
    E = x.shape[-1]
    q = x @ wq + bq
    k = x @ wk + bk
    v = x @ wv + bv
    scores = jnp.einsum("bqe,bke->bqk", q, k) / jnp.sqrt(jnp.float32(E))
    attn = jax.nn.softmax(scores, axis=-1)
    out = jnp.einsum("bqk,bke->bqe", attn, v)
    return out, attn


def _reference_matched(x, wq, wk, wv, bq, bk, bv, compute_dtype=jnp.bfloat16):
    """Reference mirroring the kernel's exact cast points (bf16 operands,
    f32 accumulation), so the comparison can be tight."""
    E = x.shape[-1]
    inv_scale = 1.0 / float(E) ** 0.5
    xc = x.astype(compute_dtype)
    wc = jnp.concatenate([wq, wk, wv], axis=1).astype(compute_dtype)
    bc = jnp.concatenate([bq, bk, bv]).astype(jnp.float32)
    qkv = jnp.einsum("bse,ef->bsf", xc, wc,
                     preferred_element_type=jnp.float32) + bc
    q = (qkv[..., :E] * inv_scale).astype(compute_dtype)
    k = qkv[..., E:2 * E].astype(compute_dtype)
    v = qkv[..., 2 * E:].astype(compute_dtype)
    scores = jnp.einsum("bqe,bke->bqk", q, k, preferred_element_type=jnp.float32)
    attn = jax.nn.softmax(scores, axis=-1)
    out = jnp.einsum("bqk,bke->bqe", attn.astype(compute_dtype), v,
                     preferred_element_type=jnp.float32)
    return out, attn


if __name__ == "__main__":
    # Small shapes consistent with the module's forward: (B, S, E)
    B, S, E = 2, 8, 32
    key = jax.random.PRNGKey(0)
    kx, kq, kk, kv, kbq, kbk, kbv = jax.random.split(key, 7)

    x = jax.random.normal(kx, (B, S, E), dtype=jnp.float32)

    # nn.Linear-style init. PyTorch's weight is (out, in); generate (out, in)
    # then transpose to (in, out) so the kernel computes x @ W + b identically.
    bound = 1.0 / float(E) ** 0.5
    wq_t = jax.random.uniform(kq, (E, E), jnp.float32, -bound, bound)
    wk_t = jax.random.uniform(kk, (E, E), jnp.float32, -bound, bound)
    wv_t = jax.random.uniform(kv, (E, E), jnp.float32, -bound, bound)
    bq = jax.random.uniform(kbq, (E,), jnp.float32, -bound, bound)
    bk = jax.random.uniform(kbk, (E,), jnp.float32, -bound, bound)
    bv = jax.random.uniform(kbv, (E,), jnp.float32, -bound, bound)

    wq, wk, wv = wq_t.T, wk_t.T, wv_t.T   # (in, out) layout for the kernel

    out, attn = self_attention(x, wq, wk, wv, bq, bk, bv)
    out = jax.block_until_ready(out)
    attn = jax.block_until_ready(attn)

    # Tight check vs. a reference that applies the same bf16/f32 cast points.
    ref_out, ref_attn = _reference_matched(x, wq, wk, wv, bq, bk, bv)
    assert jnp.allclose(out, ref_out, atol=1e-3, rtol=1e-3)
    assert jnp.allclose(attn, ref_attn, atol=1e-3, rtol=1e-3)

    # Semantics sanity check vs. the pure-f32 PyTorch-equivalent forward
    # (bf16 MXU operands introduce ~1e-3-level differences).
    f32_out, f32_attn = _reference_f32(x, wq, wk, wv, bq, bk, bv)
    assert jnp.allclose(out, f32_out, atol=5e-2, rtol=5e-2)
    assert jnp.allclose(attn, f32_attn, atol=5e-2, rtol=5e-2)

    print("KERNEL_OK")
</pallas_src>

<mosaic_0001>
module attributes {stable_mosaic.version = 11 : i64} {
  func.func @_qkv_projection_kernel(%arg0: i32, %arg1: memref<16x32xbf16, #tpu.memory_space<vmem>>, %arg2: memref<32x96xbf16, #tpu.memory_space<vmem>>, %arg3: memref<1x96xf32, #tpu.memory_space<vmem>>, %arg4: memref<16x32xbf16, #tpu.memory_space<vmem>>, %arg5: memref<16x32xbf16, #tpu.memory_space<vmem>>, %arg6: memref<16x32xbf16, #tpu.memory_space<vmem>>) attributes {dimension_semantics = [#tpu.dimension_semantics<parallel>], iteration_bounds = array<i64: 1>, scalar_prefetch = 0 : i64, scratch_operands = 0 : i64, tpu.core_type = #tpu.core_type<tc>, window_params = [{transform_indices = @transform_0, window_bounds = array<i64: 16, 32>}, {pipeline_mode = #tpu.pipeline_mode<synchronous>, transform_indices = @transform_1, window_bounds = array<i64: 32, 96>}, {pipeline_mode = #tpu.pipeline_mode<synchronous>, transform_indices = @transform_2, window_bounds = array<i64: 1, 96>}, {transform_indices = @transform_3, window_bounds = array<i64: 16, 32>}, {transform_indices = @transform_4, window_bounds = array<i64: 16, 32>}, {transform_indices = @transform_5, window_bounds = array<i64: 16, 32>}]} {
    %c0 = arith.constant 0 : index
    %c0_0 = arith.constant 0 : index
    %0 = vector.load %arg1[%c0, %c0_0] : memref<16x32xbf16, #tpu.memory_space<vmem>>, vector<16x32xbf16>
    %c0_1 = arith.constant 0 : index
    %c0_2 = arith.constant 0 : index
    %1 = vector.load %arg2[%c0_1, %c0_2] : memref<32x96xbf16, #tpu.memory_space<vmem>>, vector<32x96xbf16>
    %cst = arith.constant dense<0.000000e+00> : vector<16x96xf32>
    %2 = tpu.matmul %0, %1, %cst {dimension_numbers = #tpu.dot_dimension_numbers<[1], [0], [0], [1], [0, 0, 1, 1], [], []>} : vector<16x32xbf16>, vector<32x96xbf16>, vector<16x96xf32> -> vector<16x96xf32>
    %c0_3 = arith.constant 0 : index
    %c0_4 = arith.constant 0 : index
    %3 = vector.load %arg3[%c0_3, %c0_4] : memref<1x96xf32, #tpu.memory_space<vmem>>, vector<1x96xf32>
    %4 = vector.broadcast %3 : vector<1x96xf32> to vector<16x96xf32>
    %5 = arith.addf %2, %4 : vector<16x96xf32>
    %6 = vector.extract_strided_slice %5 {offsets = [0, 0], sizes = [16, 32], strides = [1, 1]} : vector<16x96xf32> to vector<16x32xf32>
    %cst_5 = arith.constant 0.176776692 : f32
    %7 = vector.broadcast %cst_5 : f32 to vector<16x32xf32>
    %8 = arith.mulf %6, %7 : vector<16x32xf32>
    %9 = arith.truncf %8 : vector<16x32xf32> to vector<16x32xbf16>
    %c0_6 = arith.constant 0 : index
    %c0_7 = arith.constant 0 : index
    %10 = vector.load %arg4[%c0_6, %c0_7] : memref<16x32xbf16, #tpu.memory_space<vmem>>, vector<16x32xbf16>
    tpu.vector_store %arg4[%c0_6, %c0_7], %9 {strides = array<i32>} : memref<16x32xbf16, #tpu.memory_space<vmem>>, vector<16x32xbf16>,
    %11 = vector.extract_strided_slice %5 {offsets = [0, 32], sizes = [16, 32], strides = [1, 1]} : vector<16x96xf32> to vector<16x32xf32>
    %12 = arith.truncf %11 : vector<16x32xf32> to vector<16x32xbf16>
    %c0_8 = arith.constant 0 : index
    %c0_9 = arith.constant 0 : index
    %13 = vector.load %arg5[%c0_8, %c0_9] : memref<16x32xbf16, #tpu.memory_space<vmem>>, vector<16x32xbf16>
    tpu.vector_store %arg5[%c0_8, %c0_9], %12 {strides = array<i32>} : memref<16x32xbf16, #tpu.memory_space<vmem>>, vector<16x32xbf16>,
    %14 = vector.extract_strided_slice %5 {offsets = [0, 64], sizes = [16, 32], strides = [1, 1]} : vector<16x96xf32> to vector<16x32xf32>
    %15 = arith.truncf %14 : vector<16x32xf32> to vector<16x32xbf16>
    %c0_10 = arith.constant 0 : index
    %c0_11 = arith.constant 0 : index
    %16 = vector.load %arg6[%c0_10, %c0_11] : memref<16x32xbf16, #tpu.memory_space<vmem>>, vector<16x32xbf16>
    tpu.vector_store %arg6[%c0_10, %c0_11], %15 {strides = array<i32>} : memref<16x32xbf16, #tpu.memory_space<vmem>>, vector<16x32xbf16>,
    return
  }
  func.func @transform_0(%arg0: i32) -> (i32, i32) {
    %c0_i32 = arith.constant 0 : i32
    %c0_i32_0 = arith.constant 0 : i32
    return %arg0, %c0_i32 : i32, i32
  }
  func.func @transform_1(%arg0: i32) -> (i32, i32) {
    %c0_i32 = arith.constant 0 : i32
    %c0_i32_0 = arith.constant 0 : i32
    %c0_i32_1 = arith.constant 0 : i32
    return %c0_i32, %c0_i32_0 : i32, i32
  }
  func.func @transform_2(%arg0: i32) -> (i32, i32) {
    %c0_i32 = arith.constant 0 : i32
    %c0_i32_0 = arith.constant 0 : i32
    %c0_i32_1 = arith.constant 0 : i32
    return %c0_i32, %c0_i32_0 : i32, i32
  }
  func.func @transform_3(%arg0: i32) -> (i32, i32) {
    %c0_i32 = arith.constant 0 : i32
    %c0_i32_0 = arith.constant 0 : i32
    return %arg0, %c0_i32 : i32, i32
  }
  func.func @transform_4(%arg0: i32) -> (i32, i32) {
    %c0_i32 = arith.constant 0 : i32
    %c0_i32_0 = arith.constant 0 : i32
    return %arg0, %c0_i32 : i32, i32
  }
  func.func @transform_5(%arg0: i32) -> (i32, i32) {
    %c0_i32 = arith.constant 0 : i32
    %c0_i32_0 = arith.constant 0 : i32
    return %arg0, %c0_i32 : i32, i32
  }
}

</mosaic_0001>

<llo_original>
// kernel: tpu_custom_call.1
$region0: #{tpu_custom_call.1}
  #allocation0 [shape = 'u32[]', space=smem, size = 0x4, offset = 0x4, fixed_abs, tag = 'smem constant byte address 0x4 - core index']
  #allocation1 [shape = 'u32[72,128]{1,0:T(1,128)}', space=vmem, size = 0x9000, scoped, tag = 'internal scratch']
  %s0 = inlined_call_operand.hbm [shape: bf16[16,32], index: 0, kind: input, shape index: {}]
  %s1 = inlined_call_operand.hbm [shape: bf16[32,96], index: 1, kind: input, shape index: {}]
  %s2 = inlined_call_operand.vmem [shape: f32[1,96], index: 2, kind: input, shape index: {}]
  %s3 = inlined_call_operand.hbm [shape: bf16[16,32], index: 3, kind: output, shape index: {0}]
  %s4 = inlined_call_operand.hbm [shape: bf16[16,32], index: 4, kind: output, shape index: {1}]
  %s5 = inlined_call_operand.hbm [shape: bf16[16,32], index: 5, kind: output, shape index: {2}]
  %6 = xla_tuple %s3, %s4, %s5
  %s7 = sld [smem:[#allocation0]]
  $region46: #{tpu_custom_call.1} parent=0
    _
  %s9 = ssub.s32 1, %s7
  %s10 = scalar_select 0, %s9, %s7
  $region1: #{tpu_custom_call.1} parent=0
    #allocation2 [shape = 'u8[4096]{0}', space=vmem, size = 0x1000, scoped, tag = 'input window, operand 0, single buffered']
    #allocation3 [shape = 's32[1]{0}', space=sflag, size = 0x4, scoped, tag = 'scoped memory for tpu_custom_call.1']
    #allocation4 [shape = 's32[1]{0}', space=sflag, size = 0x4, scoped, tag = 'scoped memory for tpu_custom_call.1']
    #allocation5 [shape = 'u8[8192]{0}', space=vmem, size = 0x2000, scoped, tag = 'input window, operand 1, single buffered']
    #allocation6 [shape = 's32[1]{0}', space=sflag, size = 0x4, scoped, tag = 'scoped memory for tpu_custom_call.1']
    #allocation7 [shape = 'u8[4096]{0}', space=vmem, size = 0x1000, scoped, tag = 'output window, operand 0, single buffered']
    #allocation8 [shape = 'u8[4096]{0}', space=vmem, size = 0x1000, scoped, tag = 'output window, operand 1, single buffered']
    #allocation9 [shape = 's32[1]{0}', space=sflag, size = 0x4, scoped, tag = 'scoped memory for tpu_custom_call.1']
    #allocation10 [shape = 'u8[4096]{0}', space=vmem, size = 0x1000, scoped, tag = 'output window, operand 2, single buffered']
    %11 = vsyncpa [#allocation3], 0
    %12 = vsyncpa [#allocation6], 0
    %13 = vsyncpa [#allocation4], 0
    %14 = vsyncpa [#allocation9], 0
    // Predicated region
    $region2: #{tpu_custom_call.1} parent=1 // pred_check
      _
    $region3: #{tpu_custom_call.1} parent=1 // pred_check_branch
      %16 = sbr.rel (0) target = $region5
    $region4: #{tpu_custom_call.1} parent=1 // pred_region
      %18 = vsyncadd [#allocation3], 0
      %s19 = sshll.u32 %s0, 4
      %s20 = int_to_ptr.hbm [resolvable:$true] %s19
      %s21 = sshll.u32 [#allocation2], 4
      %s22 = int_to_ptr.vmem [resolvable:$true] %s21
      %27 = dma.hbm_to_vmem [thread:$0]  %s20, 128, %s22, [#allocation3], 64, 64, 4
    $region5: #{tpu_custom_call.1} parent=1 // pred_fallthru
      _
    // Predicated region
    $region6: #{tpu_custom_call.1} parent=1 // pred_check
      _
    $region7: #{tpu_custom_call.1} parent=1 // pred_check_branch
      %29 = sbr.rel (0) target = $region9
    $region8: #{tpu_custom_call.1} parent=1 // pred_region
      %31 = vsyncadd [#allocation6], 0
      %s32 = sshll.u32 %s1, 4
      %s33 = int_to_ptr.hbm [resolvable:$true] %s32
      %s34 = sshll.u32 [#allocation5], 4
      %s35 = int_to_ptr.vmem [resolvable:$true] %s34
      %40 = dma.hbm_to_vmem [thread:$0]  %s33, 256, %s35, [#allocation6], 64, 64, 4
    $region9: #{tpu_custom_call.1} parent=1 // pred_fallthru
      _
    // Predicated region
    $region10: #{tpu_custom_call.1} parent=1 // pred_check
      _
    $region11: #{tpu_custom_call.1} parent=1 // pred_check_branch
      %42 = sbr.rel (0) target = $region13
    $region12: #{tpu_custom_call.1} parent=1 // pred_region
      _
    $region13: #{tpu_custom_call.1} parent=1 // pred_fallthru
      _
    // Predicated region
    $region14: #{tpu_custom_call.1} parent=1 // pred_check
      _
    $region15: #{tpu_custom_call.1} parent=1 // pred_check_branch
      %44 = sbr.rel (0) target = $region17
    $region16: #{tpu_custom_call.1} parent=1 // pred_region
      %46 = dma.done [#allocation3], 128
    $region17: #{tpu_custom_call.1} parent=1 // pred_fallthru
      _
    // Predicated region
    $region18: #{tpu_custom_call.1} parent=1 // pred_check
      _
    $region19: #{tpu_custom_call.1} parent=1 // pred_check_branch
      %48 = sbr.rel (0) target = $region21
    $region20: #{tpu_custom_call.1} parent=1 // pred_region
      %50 = dma.done [#allocation6], 256
    $region21: #{tpu_custom_call.1} parent=1 // pred_fallthru
      _
    %v52 = vld [vmem:[#allocation2] sm:$0xf]
    %v53 = vld [vmem:[#allocation2 + $0x4] sm:$0xf]
    %v54 = vld [vmem:[#allocation5] sm:$0xf]
    %v55 = vld [vmem:[#allocation5 + $0x4] sm:$0xf]
    %v56 = vld [vmem:[#allocation5 + $0x8] sm:$0xf]
    %v57 = vld [vmem:[#allocation5 + $0xc] sm:$0xf]
    %v58 = vld [vmem:[%s2] sm:$0x1]
    %v60 = vperm.slane %v58, 0
    %v64 = vunpack.c.l.b16 %v52
    %v65 = vunpack.c.l.b16 %v53
    %v66 = vpack.c.b16 %v65, %v64
    %v71 = vunpack.c.l.b16 %v54
    %v72 = vunpack.c.l.b16 %v55
    %v73 = vunpack.c.l.b16 %v56
    %v74 = vunpack.c.l.b16 %v57
    %v75 = vpack.c.b16 %v72, %v71
    %v76 = vpack.c.b16 %v74, %v73
    %vm79 = vcmask 261120
    %v81 = vsel %vm79, %v66, 0
    %83 = vmatpush.bf16.msra.mxu0 0
    %84 = vmatpush.bf16.msra.mxu0 0
    %85 = vmatpush.bf16.msra.mxu0 0
    %86 = vmatpush.bf16.msra.mxu0 0
    %87 = vmatpush.bf16.msra.mxu0 0
    %88 = vmatpush.bf16.msra.mxu0 0
    %89 = vmatpush.bf16.msra.mxu0 %v76
    %90 = vmatpush.bf16.msra.mxu0 %v75
    %91 = vmatmul.bf16.gmra.mxu0 %v81
    %v92 = vpop.f32.mrf.mxu0
    %v93 = vadd.f32 %v60, %v92
    %v94 = vpop.f32.mrf.mxu0
    %v95 = vadd.f32 %v60, %v94
    %96 = vdwg.mxu0
    %v97 = vmul.f32 %v93, 0.17677669
    %v98 = vmul.f32 %v95, 0.17677669
    %v99 = vpack.c.bf16 %v97, %v97
    %v100 = vpack.c.bf16 %v98, %v98
    %vm101 = vcmask 257024
    %102 = vst.msk [vmem:[#allocation7] sm:$0xf] %vm101, %v99
    %103 = vst.msk [vmem:[#allocation7 + $0x4] sm:$0xf] %vm101, %v100
    %v104 = vpack.c.bf16 %v93, %v93
    %v105 = vpack.c.bf16 %v95, %v95
    %108 = vrot.lane.b32.xlu0 %v104, 96
    %v109 = vpop.permute.xlu0 %108
    %110 = vrot.lane.b32.xlu0 %v105, 96
    %v111 = vpop.permute.xlu0 %110
    %114 = vst.msk [vmem:[#allocation8] sm:$0xf] %vm101, %v109
    %115 = vst.msk [vmem:[#allocation8 + $0x4] sm:$0xf] %vm101, %v111
    %116 = vrot.lane.b32.xlu0 %v104, 64
    %v117 = vpop.permute.xlu0 %116
    %118 = vrot.lane.b32.xlu0 %v105, 64
    %v119 = vpop.permute.xlu0 %118
    %122 = vst.msk [vmem:[#allocation10] sm:$0xf] %vm101, %v117
    %123 = vst.msk [vmem:[#allocation10 + $0x4] sm:$0xf] %vm101, %v119
    // Predicated region
    $region22: #{tpu_custom_call.1} parent=1 // pred_check
      _
    $region23: #{tpu_custom_call.1} parent=1 // pred_check_branch
      %125 = sbr.rel (0) target = $region25
    $region24: #{tpu_custom_call.1} parent=1 // pred_region
      %127 = vsyncadd [#allocation4], 0
      %s128 = sshll.u32 [#allocation7], 4
      %s129 = int_to_ptr.vmem [resolvable:$true] %s128
      %s130 = sshll.u32 %s3, 4
      %s131 = int_to_ptr.hbm [resolvable:$true] %s130
      %136 = dma.vmem_to_hbm [thread:$0]  %s129, 128, %s131, [#allocation4], 64, 64, 4
    $region25: #{tpu_custom_call.1} parent=1 // pred_fallthru
      _
    // Predicated region
    $region26: #{tpu_custom_call.1} parent=1 // pred_check
      _
    $region27: #{tpu_custom_call.1} parent=1 // pred_check_branch
      %138 = sbr.rel (0) target = $region29
    $region28: #{tpu_custom_call.1} parent=1 // pred_region
      %140 = vsyncadd [#allocation9], 0
      %s141 = sshll.u32 [#allocation8], 4
      %s142 = int_to_ptr.vmem [resolvable:$true] %s141
      %s143 = sshll.u32 %s4, 4
      %s144 = int_to_ptr.hbm [resolvable:$true] %s143
      %149 = dma.vmem_to_hbm [thread:$0]  %s142, 128, %s144, [#allocation9], 64, 64, 4
    $region29: #{tpu_custom_call.1} parent=1 // pred_fallthru
      _
    // Predicated region
    $region30: #{tpu_custom_call.1} parent=1 // pred_check
      _
    $region31: #{tpu_custom_call.1} parent=1 // pred_check_branch
      %151 = sbr.rel (0) target = $region33
    $region32: #{tpu_custom_call.1} parent=1 // pred_region
      %153 = vsyncadd [#allocation9], 0
      %s154 = sshll.u32 [#allocation10], 4
      %s155 = int_to_ptr.vmem [resolvable:$true] %s154
      %s156 = sshll.u32 %s5, 4
      %s157 = int_to_ptr.hbm [resolvable:$true] %s156
      %162 = dma.vmem_to_hbm [thread:$0]  %s155, 128, %s157, [#allocation9], 64, 64, 4
    $region33: #{tpu_custom_call.1} parent=1 // pred_fallthru
      _
    // Predicated region
    $region34: #{tpu_custom_call.1} parent=1 // pred_check
      _
    $region35: #{tpu_custom_call.1} parent=1 // pred_check_branch
      %164 = sbr.rel (0) target = $region37
    $region36: #{tpu_custom_call.1} parent=1 // pred_region
      %166 = dma.done [#allocation4], 128
    $region37: #{tpu_custom_call.1} parent=1 // pred_fallthru
      _
    // Predicated region
    $region38: #{tpu_custom_call.1} parent=1 // pred_check
      _
    $region39: #{tpu_custom_call.1} parent=1 // pred_check_branch
      %168 = sbr.rel (0) target = $region41
    $region40: #{tpu_custom_call.1} parent=1 // pred_region
      %170 = dma.done [#allocation9], 128
    $region41: #{tpu_custom_call.1} parent=1 // pred_fallthru
      _
    // Predicated region
    $region42: #{tpu_custom_call.1} parent=1 // pred_check
      _
    $region43: #{tpu_custom_call.1} parent=1 // pred_check_branch
      %172 = sbr.rel (0) target = $region45
    $region44: #{tpu_custom_call.1} parent=1 // pred_region
      %174 = dma.done [#allocation9], 128
    $region45: #{tpu_custom_call.1} parent=1 // pred_fallthru
      _
    %175 = vsyncpa [#allocation3], 1
    %176 = vsyncpa [#allocation6], 1
    %177 = vsyncpa [#allocation4], 1
    %178 = vsyncpa [#allocation9], 1

</llo_original>
